<compile_context>
chip_gen: v7x
topology: tpu7x:2x2x1
jax: 0.10.0
libtpu: 0.0.40
codegen_flags: <defaults>
</compile_context>

<pallas_src>
import functools

import jax
import jax.numpy as jnp
from jax.experimental import pallas as pl
from jax.experimental.pallas import tpu as pltpu

LANE = 128
SUBLANE = 8

# Small demo sizes consistent with the module (nn.Linear(input_size, 2)).
BATCH = 8
IN_FEATURES = 128
OUT_FEATURES = 2

_VMEM_BUDGET = 40 << 20   # target working set for auto tile sizing
_VMEM_LIMIT_CAP = 48 << 20  # scoped-VMEM request cap (leave headroom on v7x)


def _round_up(x, m):
    return (x + m - 1) // m * m


def _pad_axis(a, axis, multiple):
    size = a.shape[axis]
    pad = _round_up(size, multiple) - size
    if pad == 0:
        return a
    widths = [(0, 0)] * a.ndim
    widths[axis] = (0, pad)
    return jnp.pad(a, widths)


# -----------------------------------------------------------------------------
# Shared kernel body: one MXU matmul (f32 accumulation) + bias add.
# -----------------------------------------------------------------------------
def _linear_kernel(x_ref, w_ref, b_ref, o_ref):
    acc = jnp.dot(x_ref[...], w_ref[...], preferred_element_type=jnp.float32)
    o_ref[...] = (acc + b_ref[...]).astype(o_ref.dtype)


# -----------------------------------------------------------------------------
# Small-problem path: one full block resident in VMEM, no grid, no pipelining.
# -----------------------------------------------------------------------------
def _linear_small(x, w_t, b2d):
    B, K = x.shape
    Np = w_t.shape[1]
    isz = jnp.dtype(x.dtype).itemsize
    return pl.pallas_call(
        _linear_kernel,
        out_shape=jax.ShapeDtypeStruct((B, Np), jnp.float32),
        in_specs=[
            pl.BlockSpec(memory_space=pltpu.MemorySpace.VMEM),
            pl.BlockSpec(memory_space=pltpu.MemorySpace.VMEM),
            pl.BlockSpec(memory_space=pltpu.MemorySpace.VMEM),
        ],
        out_specs=pl.BlockSpec(memory_space=pltpu.MemorySpace.VMEM),
        cost_estimate=pl.CostEstimate(
            flops=2 * B * K * Np,
            transcendentals=0,
            bytes_accessed=isz * (B * K + K * Np) + 4 * (Np + B * Np),
        ),
    )(x, w_t, b2d)


# -----------------------------------------------------------------------------
# Scaled-up path: 1-D M-parallel grid, weight + bias fully VMEM-resident.
# -----------------------------------------------------------------------------
def _linear_tiled(x, w_t, b2d, *, tm, vmem_limit_bytes):
    B, K = x.shape
    Np = w_t.shape[1]
    isz = jnp.dtype(x.dtype).itemsize
    grid_m = pl.cdiv(B, tm)
    return pl.pallas_call(
        _linear_kernel,
        out_shape=jax.ShapeDtypeStruct((B, Np), jnp.float32),
        grid_spec=pltpu.PrefetchScalarGridSpec(
            num_scalar_prefetch=0,
            grid=(grid_m,),
            in_specs=[
                pl.BlockSpec((tm, K), lambda i: (i, 0)),   # x tile (streams)
                pl.BlockSpec((K, Np), lambda i: (0, 0)),   # W_t (resident)
                pl.BlockSpec((1, Np), lambda i: (0, 0)),   # bias (resident)
            ],
            out_specs=pl.BlockSpec((tm, Np), lambda i: (i, 0)),
        ),
        compiler_params=pltpu.CompilerParams(
            dimension_semantics=("parallel",),
            vmem_limit_bytes=vmem_limit_bytes,
        ),
        cost_estimate=pl.CostEstimate(
            flops=2 * B * K * Np,
            transcendentals=0,
            # W fetched once, x streamed once, padded-N output written once.
            bytes_accessed=isz * (B * K + K * Np) + 4 * (Np + B * Np),
        ),
    )(x, w_t, b2d)


# -----------------------------------------------------------------------------
# Public wrapper: PyTorch nn.Linear semantics  (x: (B,K), weight: (N,K), b:(N,))
# -----------------------------------------------------------------------------
@functools.partial(jax.jit, static_argnames=("tm", "compute_dtype"))
def linear_forward(x, weight, bias, *, tm=512, compute_dtype=None):
    B, K = x.shape
    N = weight.shape[0]
    Np = _round_up(N, LANE)

    # Compute dtype: accept bf16 x straight from the caller, otherwise f32.
    # Single cast -- no f32 -> bf16 round trip over x.
    if compute_dtype is None:
        compute_dtype = jnp.bfloat16 if x.dtype == jnp.bfloat16 else jnp.float32
    xc = x if x.dtype == compute_dtype else x.astype(compute_dtype)
    isz = jnp.dtype(compute_dtype).itemsize

    # Lane-dense output: zero-pad N up to a multiple of 128 (weight/bias only --
    # both tiny), so output stores are unmasked full-lane vst.
    w_t = _pad_axis(weight.astype(compute_dtype).T, 1, LANE)          # (K, Np)
    b2d = _pad_axis(bias.reshape(1, N).astype(jnp.float32), 1, LANE)  # (1, Np)

    tm = max(_round_up(tm, SUBLANE), SUBLANE)

    # Single-block path when everything trivially fits VMEM.
    small_bytes = isz * (B * K + K * Np) + 4 * (Np + B * Np)
    if B <= 512 and small_bytes <= (8 << 20):
        xp = _pad_axis(xc, 0, SUBLANE)        # cheap: small B only
        out = _linear_small(xp, w_t, b2d)
        return out[:B, :N]

    # Tiled path: cap tm at the (sublane-rounded) batch, then shrink until the
    # double-buffered working set fits the VMEM budget on all generations.
    tm_eff = min(tm, _round_up(B, SUBLANE))
    fixed = 2 * K * Np * isz + 2 * Np * 4     # resident W + bias (2 buffers)

    def _need(t):
        return fixed + 2 * t * K * isz + 2 * t * Np * 4   # x + out buffers

    while tm_eff > 64 and _need(tm_eff) > _VMEM_BUDGET:
        tm_eff //= 2
    tm_eff = max(_round_up(tm_eff, SUBLANE), SUBLANE)
    vmem_limit = int(min(max(_need(tm_eff) + (4 << 20), 16 << 20),
                         _VMEM_LIMIT_CAP))

    # No jnp.pad of x: pl.cdiv grid handles a partial final M block in-kernel.
    out = _linear_tiled(xc, w_t, b2d, tm=tm_eff, vmem_limit_bytes=vmem_limit)
    return out[:B, :N]


if __name__ == "__main__":
    key = jax.random.PRNGKey(0)
    kx, kw, kb, kx2, kw2, kb2 = jax.random.split(key, 6)

    # --- Small demo: module semantics nn.Linear(IN_FEATURES, 2) ---------------
    bound = 1.0 / jnp.sqrt(jnp.float32(IN_FEATURES))
    weight = jax.random.uniform(
        kw, (OUT_FEATURES, IN_FEATURES), jnp.float32, -bound, bound
    )
    bias = jax.random.uniform(kb, (OUT_FEATURES,), jnp.float32, -bound, bound)
    x = jax.random.normal(kx, (BATCH, IN_FEATURES), jnp.float32)

    out = jax.block_until_ready(linear_forward(x, weight, bias))
    ref = x @ weight.T + bias
    assert out.shape == (BATCH, OUT_FEATURES)
    assert jnp.allclose(out, ref, atol=1e-5, rtol=1e-5)

    # --- Tiled-path check (stand-in for the 4096-feature workload) ------------
    B2, K2 = 1024, 512          # 2 M tiles of 512 -> exercises megacore sharding
    bound2 = 1.0 / jnp.sqrt(jnp.float32(K2))
    weight2 = jax.random.uniform(
        kw2, (OUT_FEATURES, K2), jnp.float32, -bound2, bound2
    )
    bias2 = jax.random.uniform(kb2, (OUT_FEATURES,), jnp.float32, -bound2, bound2)
    x2 = jax.random.normal(kx2, (B2, K2), jnp.float32)

    out2 = jax.block_until_ready(linear_forward(x2, weight2, bias2))
    ref2 = x2 @ weight2.T + bias2
    assert out2.shape == (B2, OUT_FEATURES)
    assert jnp.allclose(out2, ref2, atol=1e-4, rtol=1e-4)

    # --- bf16 compute path (f32 accumulation), halves HBM bytes on x ----------
    out2_bf16 = jax.block_until_ready(
        linear_forward(x2.astype(jnp.bfloat16), weight2, bias2)
    )
    assert out2_bf16.shape == (B2, OUT_FEATURES)
    assert jnp.allclose(out2_bf16, ref2, atol=5e-2, rtol=5e-2)

    print("KERNEL_OK")
</pallas_src>

<mosaic_0001>
module attributes {stable_mosaic.version = 11 : i64} {
  func.func @_linear_kernel(%arg0: memref<8x128xf32, #tpu.memory_space<vmem>>, %arg1: memref<128x128xf32, #tpu.memory_space<vmem>>, %arg2: memref<1x128xf32, #tpu.memory_space<vmem>>, %arg3: memref<8x128xf32, #tpu.memory_space<vmem>>) attributes {dimension_semantics = [], scalar_prefetch = 0 : i64, scratch_operands = 0 : i64, tpu.core_type = #tpu.core_type<tc>} {
    %c0 = arith.constant 0 : index
    %c0_0 = arith.constant 0 : index
    %0 = vector.load %arg0[%c0, %c0_0] : memref<8x128xf32, #tpu.memory_space<vmem>>, vector<8x128xf32>
    %c0_1 = arith.constant 0 : index
    %c0_2 = arith.constant 0 : index
    %1 = vector.load %arg1[%c0_1, %c0_2] : memref<128x128xf32, #tpu.memory_space<vmem>>, vector<128x128xf32>
    %cst = arith.constant dense<0.000000e+00> : vector<8x128xf32>
    %2 = tpu.matmul %0, %1, %cst {dimension_numbers = #tpu.dot_dimension_numbers<[1], [0], [0], [1], [0, 0, 1, 1], [], []>} : vector<8x128xf32>, vector<128x128xf32>, vector<8x128xf32> -> vector<8x128xf32>
    %c0_3 = arith.constant 0 : index
    %c0_4 = arith.constant 0 : index
    %3 = vector.load %arg2[%c0_3, %c0_4] : memref<1x128xf32, #tpu.memory_space<vmem>>, vector<1x128xf32>
    %4 = vector.broadcast %3 : vector<1x128xf32> to vector<8x128xf32>
    %5 = arith.addf %2, %4 : vector<8x128xf32>
    %c0_5 = arith.constant 0 : index
    %c0_6 = arith.constant 0 : index
    %6 = vector.load %arg3[%c0_5, %c0_6] : memref<8x128xf32, #tpu.memory_space<vmem>>, vector<8x128xf32>
    tpu.vector_store %arg3[%c0_5, %c0_6], %5 {strides = array<i32>} : memref<8x128xf32, #tpu.memory_space<vmem>>, vector<8x128xf32>,
    return
  }
}

</mosaic_0001>

<llo_original>
// kernel: linear_forward.1
$region0: #{linear_forward.1}
  #allocation0 [shape = 'u32[]', space=smem, size = 0x4, offset = 0x4, fixed_abs, tag = 'smem constant byte address 0x4 - core index']
  #allocation1 [shape = 'u32[144,128]{1,0:T(1,128)}', space=vmem, size = 0x12000, scoped, tag = 'internal scratch']
  %s0 = inlined_call_operand.vmem [shape: f32[8,128], index: 0, kind: input, shape index: {}]
  %s1 = inlined_call_operand.vmem [shape: f32[128,128], index: 1, kind: input, shape index: {}]
  %s2 = inlined_call_operand.vmem [shape: f32[1,128], index: 2, kind: input, shape index: {}]
  %s3 = inlined_call_operand.vmem [shape: f32[8,128], index: 3, kind: output, shape index: {}]
  %s4 = sld [smem:[#allocation0]]
  $region22: #{linear_forward.1} parent=0
    _
  %s6 = ssub.s32 1, %s4
  %s7 = scalar_select 0, %s6, %s4
  // Predicated region
  $region2: #{linear_forward.1} parent=0 // pred_check
    _
  $region3: #{linear_forward.1} parent=0 // pred_check_branch
    %9 = sbr.rel (0) target = $region5
  $region4: #{linear_forward.1} parent=0 // pred_region
    _
  $region5: #{linear_forward.1} parent=0 // pred_fallthru
    _
  // Predicated region
  $region6: #{linear_forward.1} parent=0 // pred_check
    _
  $region7: #{linear_forward.1} parent=0 // pred_check_branch
    %11 = sbr.rel (0) target = $region9
  $region8: #{linear_forward.1} parent=0 // pred_region
    _
  $region9: #{linear_forward.1} parent=0 // pred_fallthru
    _
  // Predicated region
  $region10: #{linear_forward.1} parent=0 // pred_check
    _
  $region11: #{linear_forward.1} parent=0 // pred_check_branch
    %13 = sbr.rel (0) target = $region13
  $region12: #{linear_forward.1} parent=0 // pred_region
    _
  $region13: #{linear_forward.1} parent=0 // pred_fallthru
    _
  %v14 = vld [vmem:[%s0] sm:$0xff]
  %v15 = vld [vmem:[%s1] sm:$0xff]
  %v16 = vld [vmem:[%s1 + $0x8] sm:$0xff]
  %v17 = vld [vmem:[%s1 + $0x10] sm:$0xff]
  %v18 = vld [vmem:[%s1 + $0x18] sm:$0xff]
  %v19 = vld [vmem:[%s1 + $0x20] sm:$0xff]
  %v20 = vld [vmem:[%s1 + $0x28] sm:$0xff]
  %v21 = vld [vmem:[%s1 + $0x30] sm:$0xff]
  %v22 = vld [vmem:[%s1 + $0x38] sm:$0xff]
  %v23 = vld [vmem:[%s1 + $0x40] sm:$0xff]
  %v24 = vld [vmem:[%s1 + $0x48] sm:$0xff]
  %v25 = vld [vmem:[%s1 + $0x50] sm:$0xff]
  %v26 = vld [vmem:[%s1 + $0x58] sm:$0xff]
  %v27 = vld [vmem:[%s1 + $0x60] sm:$0xff]
  %v28 = vld [vmem:[%s1 + $0x68] sm:$0xff]
  %v29 = vld [vmem:[%s1 + $0x70] sm:$0xff]
  %v30 = vld [vmem:[%s1 + $0x78] sm:$0xff]
  %v31 = vld [vmem:[%s2] sm:$0x1]
  %v33 = vlaneseq
  %v34 = vshrl.u32 %v33, 7
  %v35 = vsub.s32 0, %v34
  %v36 = vrot.slane %v31, %v35
  %38 = vmatprep.subr.mxu0 0.0
  %39 = vmatpush1.msra.mxu0 %v15
  %40 = vmatprep.subr.mxu0 0.0
  %41 = vmatpush1.msra.mxu0 %v16
  %42 = vmatprep.subr.mxu0 0.0
  %43 = vmatpush1.msra.mxu0 %v17
  %44 = vmatprep.subr.mxu0 0.0
  %45 = vmatpush1.msra.mxu0 %v18
  %46 = vmatprep.subr.mxu0 0.0
  %47 = vmatpush1.msra.mxu0 %v19
  %48 = vmatprep.subr.mxu0 0.0
  %49 = vmatpush1.msra.mxu0 %v20
  %50 = vmatprep.subr.mxu0 0.0
  %51 = vmatpush1.msra.mxu0 %v21
  %52 = vmatprep.subr.mxu0 0.0
  %53 = vmatpush1.msra.mxu0 %v22
  %54 = vmatprep.subr.mxu0 0.0
  %55 = vmatpush1.msra.mxu0 %v23
  %56 = vmatprep.subr.mxu0 0.0
  %57 = vmatpush1.msra.mxu0 %v24
  %58 = vmatprep.subr.mxu0 0.0
  %59 = vmatpush1.msra.mxu0 %v25
  %60 = vmatprep.subr.mxu0 0.0
  %61 = vmatpush1.msra.mxu0 %v26
  %62 = vmatprep.subr.mxu0 0.0
  %63 = vmatpush1.msra.mxu0 %v27
  %64 = vmatprep.subr.mxu0 0.0
  %65 = vmatpush1.msra.mxu0 %v28
  %66 = vmatprep.subr.mxu0 0.0
  %67 = vmatpush1.msra.mxu0 %v29
  %68 = vmatprep.subr.mxu0 0.0
  %69 = vmatpush1.msra.mxu0 %v30
  %70 = vmatprep.subr.mxu0 0.0
  %71 = vmatpush1.msra.mxu0 0.0
  %72 = vmatprep.subr.mxu0 0.0
  %73 = vmatpush1.msra.mxu0 0.0
  %74 = vmatprep.subr.mxu0 0.0
  %75 = vmatpush1.msra.mxu0 0.0
  %76 = vmatprep.subr.mxu0 0.0
  %77 = vmatpush1.msra.mxu0 0.0
  %78 = vmatprep.subr.mxu0 0.0
  %79 = vmatpush1.msra.mxu0 0.0
  %80 = vmatprep.subr.mxu0 0.0
  %81 = vmatpush1.msra.mxu0 0.0
  %82 = vmatprep.subr.mxu0 0.0
  %83 = vmatpush1.msra.mxu0 0.0
  %84 = vmatprep.subr.mxu0 0.0
  %85 = vmatpush1.msra.mxu0 0.0
  %86 = vmatprep.subr.mxu0 0.0
  %87 = vmatpush1.msra.mxu0 0.0
  %88 = vmatprep.subr.mxu0 0.0
  %89 = vmatpush1.msra.mxu0 0.0
  %90 = vmatprep.subr.mxu0 0.0
  %91 = vmatpush1.msra.mxu0 0.0
  %92 = vmatprep.subr.mxu0 0.0
  %93 = vmatpush1.msra.mxu0 0.0
  %94 = vmatprep.subr.mxu0 0.0
  %95 = vmatpush1.msra.mxu0 0.0
  %96 = vmatprep.subr.mxu0 0.0
  %97 = vmatpush1.msra.mxu0 0.0
  %98 = vmatprep.subr.mxu0 0.0
  %99 = vmatpush1.msra.mxu0 0.0
  %100 = vmatprep.subr.mxu0 0.0
  %101 = vmatpush1.msra.mxu0 0.0
  %102 = vmatprep.mubr.f32.mxu0 0.0
  %103 = vmatmul.mubr.f32.gmra.mrb[0].mxu0 %v14
  %v104 = vpop.f32.mrb[0].mxu0
  %v105 = vadd.f32 %v36, %v104
  %v106 = vpop.f32.mrb[0].mxu0
  %107 = vdwg.mxu0
  %108 = vst [vmem:[%s3] sm:$0xff] %v105
  // Predicated region
  $region14: #{linear_forward.1} parent=0 // pred_check
    _
  $region15: #{linear_forward.1} parent=0 // pred_check_branch
    %110 = sbr.rel (0) target = $region17
  $region16: #{linear_forward.1} parent=0 // pred_region
    _
  $region17: #{linear_forward.1} parent=0 // pred_fallthru
    _
  // Predicated region
  $region18: #{linear_forward.1} parent=0 // pred_check
    _
  $region19: #{linear_forward.1} parent=0 // pred_check_branch
    %112 = sbr.rel (0) target = $region21
  $region20: #{linear_forward.1} parent=0 // pred_region
    _
  $region21: #{linear_forward.1} parent=0 // pred_fallthru
    _

</llo_original>
